<compile_context>
chip_gen: v6e
topology: v6e:2x2x1
jax: 0.10.0
libtpu: 0.0.40
codegen_flags: <defaults>
</compile_context>

<pallas_src>
import functools

import jax
import jax.numpy as jnp
from jax.experimental import pallas as pl
from jax.experimental.pallas import tpu as pltpu


def _round_up(x, m):
    return (x + m - 1) // m * m


# ---------------------------------------------------------------------------
# Fused kernel: all GraphConv layers + ReLU/BN + final max, fully VMEM-resident.
# ---------------------------------------------------------------------------
def _gcn_fused_kernel(adj_ref, x_ref, w_ref, b_ref, xemb_ref, out_ref,
                      *, num_layers, bn_feat_dim):
    adj = adj_ref[...]                    # (B, N, N) bf16, self-loop folded in
    B, N, _ = adj.shape
    Dp = x_ref.shape[-1]
    inv_count = 1.0 / float(B * bn_feat_dim)

    def conv(h, l):
        # y = (adj + I) @ h ; z = y @ W[l] + b[l] ; z = L2-normalize(z, dim=2)
        # MXU operands bf16, accumulation f32; epilogue f32 with rsqrt (EUP).
        hb = h.astype(jnp.bfloat16)
        y = jnp.einsum("bij,bjd->bid", adj, hb,
                       preferred_element_type=jnp.float32)
        z = jnp.dot(y.astype(jnp.bfloat16).reshape(B * N, Dp), w_ref[l],
                    preferred_element_type=jnp.float32)
        z = z.reshape(B, N, Dp) + b_ref[l]
        # F.normalize(z, p=2, dim=2): z / max(||z||_2, 1e-12).  Padded lanes of
        # z are exactly 0 (zero-padded weight cols / bias), so the full-lane
        # sum of squares is correct.
        ss = jnp.sum(z * z, axis=-1, keepdims=True)
        return z * jax.lax.rsqrt(jnp.maximum(ss, 1e-24))

    def hidden_layer(l, h):
        z = conv(h, l)
        # ReLU + fresh training-mode BatchNorm1d(num_nodes): per-node stats
        # over (batch, feature), biased variance, eps=1e-5, identity affine.
        # Padded lanes of h are exactly 0 here, so full-lane sums are correct
        # with count = B * bn_feat_dim; no mask needed.
        h = jnp.maximum(z, 0.0)
        mean = jnp.sum(h, axis=(0, 2), keepdims=True) * inv_count
        ex2 = jnp.sum(h * h, axis=(0, 2), keepdims=True) * inv_count
        var = jnp.maximum(ex2 - mean * mean, 0.0)
        return (h - mean) * jax.lax.rsqrt(var + 1e-5)
        # (padded lanes become -mean*rsqrt(...), but the next layer's
        #  zero-padded weight rows make them inert.)

    h = x_ref[...]                        # (B, N, Dp) f32, zero-padded features
    n_hidden = num_layers - 1
    if n_hidden <= 4:
        # Small depth: trace-time unroll gives the scheduler full visibility.
        for l in range(n_hidden):
            h = hidden_layer(l, h)
    else:
        # Deep nets: bound live ranges / code size with a real loop.
        h = jax.lax.fori_loop(0, n_hidden, hidden_layer, h)

    z = conv(h, num_layers - 1)
    xemb_ref[...] = z.astype(xemb_ref.dtype)     # bf16 writeback (half bytes)
    out_ref[...] = jnp.max(z, axis=1)            # fused max over nodes, f32


def gcn_forward(params, x, adj):
    """Returns (x_embed [B, N, embedding_dim], out [B, embedding_dim])."""
    B, N, Din = x.shape
    w_list = [params["w_first"]] + [w for (w, _) in params["block"]] \
        + [params["w_last"]]
    b_list = [params["b_first"]] + [b for (_, b) in params["block"]] \
        + [params["b_last"]]
    L = len(w_list)
    hidden_dim = params["w_first"].shape[1]
    emb_dim = params["w_last"].shape[1]

    # Lane-dense padded feature width (multiple of 128).
    Dp = _round_up(max([Din] + [int(w.shape[1]) for w in w_list]), 128)

    # Fold the self-loop (add_self) into adj once; store matmul operands bf16.
    adj_b = (adj.astype(jnp.float32)
             + jnp.eye(N, dtype=jnp.float32)[None]).astype(jnp.bfloat16)

    # Zero-pad features / weights / biases.  Zeros in padded weight rows/cols
    # keep the padded lanes from ever contaminating true features.
    x_p = jnp.zeros((B, N, Dp), jnp.float32).at[:, :, :Din].set(x)
    w_p = jnp.zeros((L, Dp, Dp), jnp.bfloat16)
    b_p = jnp.zeros((L, 1, Dp), jnp.float32)
    for l, (w, b) in enumerate(zip(w_list, b_list)):
        di, do = w.shape
        w_p = w_p.at[l, :di, :do].set(w.astype(jnp.bfloat16))
        b_p = b_p.at[l, 0, :do].set(b)

    kernel = functools.partial(_gcn_fused_kernel, num_layers=L,
                               bn_feat_dim=hidden_dim)

    # Explicit scoped-VMEM budget: resident operands + a few f32 (B,N,Dp)
    # temporaries, with 2x headroom; clamped to stay within physical VMEM on
    # every generation (v7x = 64 MiB per TC).
    h_bytes = B * N * Dp * 4
    resident = (B * N * N * 2 + B * N * Dp * 4 + L * Dp * Dp * 2 + L * Dp * 4
                + B * N * Dp * 2 + B * Dp * 4)
    vmem_limit = int(min(64 * 1024 * 1024,
                         max(32 * 1024 * 1024, 2 * (resident + 6 * h_bytes))))

    vmem = pltpu.MemorySpace.VMEM
    xemb_p, out_p = pl.pallas_call(
        kernel,
        # No grid: single invocation, single-buffered whole-array VMEM blocks
        # (the previous grid=(1,) paid for never-used double buffering).
        out_shape=(jax.ShapeDtypeStruct((B, N, Dp), jnp.bfloat16),
                   jax.ShapeDtypeStruct((B, Dp), jnp.float32)),
        in_specs=[pl.BlockSpec(memory_space=vmem),   # adj (+I), bf16
                  pl.BlockSpec(memory_space=vmem),   # x (padded), f32
                  pl.BlockSpec(memory_space=vmem),   # stacked weights, bf16
                  pl.BlockSpec(memory_space=vmem)],  # stacked biases, f32
        out_specs=(pl.BlockSpec(memory_space=vmem),
                   pl.BlockSpec(memory_space=vmem)),
        compiler_params=pltpu.CompilerParams(vmem_limit_bytes=vmem_limit),
    )(adj_b, x_p, w_p, b_p)

    return xemb_p[:, :, :emb_dim].astype(jnp.float32), out_p[:, :emb_dim]


# ---------------------------------------------------------------------------
# Parameter init (kaiming-style uniform; bias = 0), deterministic.
# ---------------------------------------------------------------------------
def kaiming_uniform(key, fan_in, fan_out):
    bound = (6.0 / fan_in) ** 0.5
    return jax.random.uniform(key, (fan_in, fan_out), jnp.float32, -bound, bound)


def init_gcn_params(key, input_dim, hidden_dim, embedding_dim, num_layers):
    keys = jax.random.split(key, num_layers)
    params = {
        "w_first": kaiming_uniform(keys[0], input_dim, hidden_dim),
        "b_first": jnp.zeros((hidden_dim,), jnp.float32),
        "block": [],
        "w_last": kaiming_uniform(keys[-1], hidden_dim, embedding_dim),
        "b_last": jnp.zeros((embedding_dim,), jnp.float32),
    }
    for i in range(num_layers - 2):
        params["block"].append(
            (kaiming_uniform(keys[1 + i], hidden_dim, hidden_dim),
             jnp.zeros((hidden_dim,), jnp.float32)))
    return params


# ---------------------------------------------------------------------------
# Pure-JAX reference.  matmul_dtype=float32 reproduces the PyTorch numerics
# exactly; matmul_dtype=bfloat16 reproduces the kernel's MXU operand casts.
# ---------------------------------------------------------------------------
def _reference_forward(params, x, adj, matmul_dtype=jnp.float32):
    N = x.shape[1]
    adj_i = (adj + jnp.eye(N, dtype=adj.dtype)[None]).astype(matmul_dtype)

    def conv(h, w, b):
        y = jnp.einsum("bij,bjd->bid", adj_i, h.astype(matmul_dtype),
                       preferred_element_type=jnp.float32)
        y = jnp.einsum("bnd,de->bne", y.astype(matmul_dtype),
                       w.astype(matmul_dtype),
                       preferred_element_type=jnp.float32) + b
        nrm = jnp.sqrt(jnp.sum(y * y, axis=-1, keepdims=True))
        return y / jnp.maximum(nrm, 1e-12)

    def relu_bn(h):
        h = jnp.maximum(h, 0.0)
        mean = jnp.mean(h, axis=(0, 2), keepdims=True)
        var = jnp.mean(jnp.square(h - mean), axis=(0, 2), keepdims=True)
        return (h - mean) * jax.lax.rsqrt(var + 1e-5)

    h = relu_bn(conv(x, params["w_first"], params["b_first"]))
    for w, b in params["block"]:
        h = relu_bn(conv(h, w, b))
    h = conv(h, params["w_last"], params["b_last"])
    return h, jnp.max(h, axis=1)


if __name__ == "__main__":
    B, N = 2, 16
    input_dim, hidden_dim, embedding_dim, num_layers = 8, 16, 32, 3

    key = jax.random.PRNGKey(0)
    kx, kadj, kp = jax.random.split(key, 3)

    x = jax.random.normal(kx, (B, N, input_dim), jnp.float32)
    # simple dense (symmetric-ish) adjacency with self loops
    a = jax.random.uniform(kadj, (B, N, N), jnp.float32)
    adj = 0.5 * (a + jnp.swapaxes(a, 1, 2)) + jnp.eye(N, dtype=jnp.float32)[None]

    params = init_gcn_params(kp, input_dim, hidden_dim, embedding_dim, num_layers)

    x_embed, out = jax.jit(gcn_forward)(params, x, adj)
    jax.block_until_ready((x_embed, out))

    assert x_embed.shape == (B, N, embedding_dim)
    assert out.shape == (B, embedding_dim)
    assert bool(jnp.all(jnp.isfinite(x_embed))) and bool(jnp.all(jnp.isfinite(out)))

    # Kernel-logic check: JAX reference using the SAME bf16 MXU operand casts.
    x_m, out_m = _reference_forward(params, x, adj, matmul_dtype=jnp.bfloat16)
    assert float(jnp.max(jnp.abs(x_embed - x_m))) < 2e-2
    assert float(jnp.max(jnp.abs(out - out_m))) < 2e-2

    # Semantic sanity check vs. the exact f32 PyTorch-equivalent reference
    # (bf16 MXU operands shift numerics slightly -> looser tolerance).
    x_f, out_f = _reference_forward(params, x, adj, matmul_dtype=jnp.float32)
    assert float(jnp.max(jnp.abs(x_embed - x_f))) < 6e-2
    assert float(jnp.max(jnp.abs(out - out_f))) < 6e-2

    print("KERNEL_OK")
</pallas_src>

<mosaic_0001>
module attributes {stable_mosaic.version = 11 : i64} {
  func.func @_gcn_fused_kernel(%arg0: memref<2x16x16xbf16, #tpu.memory_space<vmem>>, %arg1: memref<2x16x128xf32, #tpu.memory_space<vmem>>, %arg2: memref<3x128x128xbf16, #tpu.memory_space<vmem>>, %arg3: memref<3x1x128xf32, #tpu.memory_space<vmem>>, %arg4: memref<2x16x128xbf16, #tpu.memory_space<vmem>>, %arg5: memref<2x128xf32, #tpu.memory_space<vmem>>) attributes {dimension_semantics = [], scalar_prefetch = 0 : i64, scratch_operands = 0 : i64, tpu.core_type = #tpu.core_type<tc>} {
    %c0 = arith.constant 0 : index
    %c0_0 = arith.constant 0 : index
    %c0_1 = arith.constant 0 : index
    %0 = vector.load %arg0[%c0, %c0_0, %c0_1] : memref<2x16x16xbf16, #tpu.memory_space<vmem>>, vector<2x16x16xbf16>
    %c0_2 = arith.constant 0 : index
    %c0_3 = arith.constant 0 : index
    %c0_4 = arith.constant 0 : index
    %1 = vector.load %arg1[%c0_2, %c0_3, %c0_4] : memref<2x16x128xf32, #tpu.memory_space<vmem>>, vector<2x16x128xf32>
    %2 = arith.truncf %1 : vector<2x16x128xf32> to vector<2x16x128xbf16>
    "tpu.trace_start"() <{level = 10 : i32, message = "bij,bjd->bid"}> : () -> ()
    %cst = arith.constant dense<0.000000e+00> : vector<2x16x128xf32>
    %3 = tpu.matmul %0, %2, %cst {dimension_numbers = #tpu.dot_dimension_numbers<[2], [1], [1], [2], [0, 0, 0, 1, 1, 2], [0], [0]>} : vector<2x16x16xbf16>, vector<2x16x128xbf16>, vector<2x16x128xf32> -> vector<2x16x128xf32>
    "tpu.trace_stop"() : () -> ()
    %4 = arith.truncf %3 : vector<2x16x128xf32> to vector<2x16x128xbf16>
    %5 = vector.shape_cast %4 : vector<2x16x128xbf16> to vector<32x128xbf16>
    %c0_5 = arith.constant 0 : index
    %c0_6 = arith.constant 0 : index
    %c0_7 = arith.constant 0 : index
    %6 = vector.load %arg2[%c0_5, %c0_6, %c0_7] : memref<3x128x128xbf16, #tpu.memory_space<vmem>>, vector<1x128x128xbf16>
    %7 = vector.shape_cast %6 : vector<1x128x128xbf16> to vector<128x128xbf16>
    %cst_8 = arith.constant dense<0.000000e+00> : vector<32x128xf32>
    %8 = tpu.matmul %5, %7, %cst_8 {dimension_numbers = #tpu.dot_dimension_numbers<[1], [0], [0], [1], [0, 0, 1, 1], [], []>} : vector<32x128xbf16>, vector<128x128xbf16>, vector<32x128xf32> -> vector<32x128xf32>
    %9 = vector.shape_cast %8 : vector<32x128xf32> to vector<2x16x128xf32>
    %c0_9 = arith.constant 0 : index
    %c0_10 = arith.constant 0 : index
    %c0_11 = arith.constant 0 : index
    %10 = vector.load %arg3[%c0_9, %c0_10, %c0_11] : memref<3x1x128xf32, #tpu.memory_space<vmem>>, vector<1x1x128xf32>
    %11 = vector.shape_cast %10 : vector<1x1x128xf32> to vector<1x128xf32>
    %12 = vector.shape_cast %11 : vector<1x128xf32> to vector<1x1x128xf32>
    %13 = vector.broadcast %12 : vector<1x1x128xf32> to vector<2x16x128xf32>
    %14 = arith.addf %9, %13 : vector<2x16x128xf32>
    %15 = arith.mulf %14, %14 : vector<2x16x128xf32>
    %cst_12 = arith.constant dense<0.000000e+00> : vector<2x16xf32>
    %16 = vector.multi_reduction <add>, %15, %cst_12 [2] : vector<2x16x128xf32> to vector<2x16xf32>
    %17 = vector.shape_cast %16 : vector<2x16xf32> to vector<2x16x1xf32>
    %cst_13 = arith.constant 1.000000e-24 : f32
    %18 = vector.broadcast %cst_13 : f32 to vector<2x16x1xf32>
    %19 = arith.maximumf %17, %18 : vector<2x16x1xf32>
    %20 = math.rsqrt %19 : vector<2x16x1xf32>
    %21 = vector.broadcast %20 : vector<2x16x1xf32> to vector<2x16x128xf32>
    %22 = arith.mulf %14, %21 : vector<2x16x128xf32>
    %cst_14 = arith.constant 0.000000e+00 : f32
    %23 = vector.broadcast %cst_14 : f32 to vector<2x16x128xf32>
    %24 = arith.maximumf %22, %23 : vector<2x16x128xf32>
    %cst_15 = arith.constant dense<0.000000e+00> : vector<16xf32>
    %25 = vector.multi_reduction <add>, %24, %cst_15 [0, 2] : vector<2x16x128xf32> to vector<16xf32>
    %26 = vector.shape_cast %25 : vector<16xf32> to vector<1x16x1xf32>
    %cst_16 = arith.constant 3.125000e-02 : f32
    %27 = vector.broadcast %cst_16 : f32 to vector<1x16x1xf32>
    %28 = arith.mulf %26, %27 : vector<1x16x1xf32>
    %29 = arith.mulf %24, %24 : vector<2x16x128xf32>
    %cst_17 = arith.constant dense<0.000000e+00> : vector<16xf32>
    %30 = vector.multi_reduction <add>, %29, %cst_17 [0, 2] : vector<2x16x128xf32> to vector<16xf32>
    %31 = vector.shape_cast %30 : vector<16xf32> to vector<1x16x1xf32>
    %cst_18 = arith.constant 3.125000e-02 : f32
    %32 = vector.broadcast %cst_18 : f32 to vector<1x16x1xf32>
    %33 = arith.mulf %31, %32 : vector<1x16x1xf32>
    %34 = arith.mulf %28, %28 : vector<1x16x1xf32>
    %35 = arith.subf %33, %34 : vector<1x16x1xf32>
    %cst_19 = arith.constant 0.000000e+00 : f32
    %36 = vector.broadcast %cst_19 : f32 to vector<1x16x1xf32>
    %37 = arith.maximumf %35, %36 : vector<1x16x1xf32>
    %38 = vector.broadcast %28 : vector<1x16x1xf32> to vector<2x16x128xf32>
    %39 = arith.subf %24, %38 : vector<2x16x128xf32>
    %cst_20 = arith.constant 9.99999974E-6 : f32
    %40 = vector.broadcast %cst_20 : f32 to vector<1x16x1xf32>
    %41 = arith.addf %37, %40 : vector<1x16x1xf32>
    %42 = math.rsqrt %41 : vector<1x16x1xf32>
    %43 = vector.broadcast %42 : vector<1x16x1xf32> to vector<2x16x128xf32>
    %44 = arith.mulf %39, %43 : vector<2x16x128xf32>
    %45 = arith.truncf %44 : vector<2x16x128xf32> to vector<2x16x128xbf16>
    "tpu.trace_start"() <{level = 10 : i32, message = "bij,bjd->bid"}> : () -> ()
    %cst_21 = arith.constant dense<0.000000e+00> : vector<2x16x128xf32>
    %46 = tpu.matmul %0, %45, %cst_21 {dimension_numbers = #tpu.dot_dimension_numbers<[2], [1], [1], [2], [0, 0, 0, 1, 1, 2], [0], [0]>} : vector<2x16x16xbf16>, vector<2x16x128xbf16>, vector<2x16x128xf32> -> vector<2x16x128xf32>
    "tpu.trace_stop"() : () -> ()
    %47 = arith.truncf %46 : vector<2x16x128xf32> to vector<2x16x128xbf16>
    %48 = vector.shape_cast %47 : vector<2x16x128xbf16> to vector<32x128xbf16>
    %c1 = arith.constant 1 : index
    %c0_22 = arith.constant 0 : index
    %c0_23 = arith.constant 0 : index
    %49 = vector.load %arg2[%c1, %c0_22, %c0_23] : memref<3x128x128xbf16, #tpu.memory_space<vmem>>, vector<1x128x128xbf16>
    %50 = vector.shape_cast %49 : vector<1x128x128xbf16> to vector<128x128xbf16>
    %cst_24 = arith.constant dense<0.000000e+00> : vector<32x128xf32>
    %51 = tpu.matmul %48, %50, %cst_24 {dimension_numbers = #tpu.dot_dimension_numbers<[1], [0], [0], [1], [0, 0, 1, 1], [], []>} : vector<32x128xbf16>, vector<128x128xbf16>, vector<32x128xf32> -> vector<32x128xf32>
    %52 = vector.shape_cast %51 : vector<32x128xf32> to vector<2x16x128xf32>
    %c1_25 = arith.constant 1 : index
    %c0_26 = arith.constant 0 : index
    %c0_27 = arith.constant 0 : index
    %53 = vector.load %arg3[%c1_25, %c0_26, %c0_27] : memref<3x1x128xf32, #tpu.memory_space<vmem>>, vector<1x1x128xf32>
    %54 = vector.shape_cast %53 : vector<1x1x128xf32> to vector<1x128xf32>
    %55 = vector.shape_cast %54 : vector<1x128xf32> to vector<1x1x128xf32>
    %56 = vector.broadcast %55 : vector<1x1x128xf32> to vector<2x16x128xf32>
    %57 = arith.addf %52, %56 : vector<2x16x128xf32>
    %58 = arith.mulf %57, %57 : vector<2x16x128xf32>
    %cst_28 = arith.constant dense<0.000000e+00> : vector<2x16xf32>
    %59 = vector.multi_reduction <add>, %58, %cst_28 [2] : vector<2x16x128xf32> to vector<2x16xf32>
    %60 = vector.shape_cast %59 : vector<2x16xf32> to vector<2x16x1xf32>
    %cst_29 = arith.constant 1.000000e-24 : f32
    %61 = vector.broadcast %cst_29 : f32 to vector<2x16x1xf32>
    %62 = arith.maximumf %60, %61 : vector<2x16x1xf32>
    %63 = math.rsqrt %62 : vector<2x16x1xf32>
    %64 = vector.broadcast %63 : vector<2x16x1xf32> to vector<2x16x128xf32>
    %65 = arith.mulf %57, %64 : vector<2x16x128xf32>
    %cst_30 = arith.constant 0.000000e+00 : f32
    %66 = vector.broadcast %cst_30 : f32 to vector<2x16x128xf32>
    %67 = arith.maximumf %65, %66 : vector<2x16x128xf32>
    %cst_31 = arith.constant dense<0.000000e+00> : vector<16xf32>
    %68 = vector.multi_reduction <add>, %67, %cst_31 [0, 2] : vector<2x16x128xf32> to vector<16xf32>
    %69 = vector.shape_cast %68 : vector<16xf32> to vector<1x16x1xf32>
    %cst_32 = arith.constant 3.125000e-02 : f32
    %70 = vector.broadcast %cst_32 : f32 to vector<1x16x1xf32>
    %71 = arith.mulf %69, %70 : vector<1x16x1xf32>
    %72 = arith.mulf %67, %67 : vector<2x16x128xf32>
    %cst_33 = arith.constant dense<0.000000e+00> : vector<16xf32>
    %73 = vector.multi_reduction <add>, %72, %cst_33 [0, 2] : vector<2x16x128xf32> to vector<16xf32>
    %74 = vector.shape_cast %73 : vector<16xf32> to vector<1x16x1xf32>
    %cst_34 = arith.constant 3.125000e-02 : f32
    %75 = vector.broadcast %cst_34 : f32 to vector<1x16x1xf32>
    %76 = arith.mulf %74, %75 : vector<1x16x1xf32>
    %77 = arith.mulf %71, %71 : vector<1x16x1xf32>
    %78 = arith.subf %76, %77 : vector<1x16x1xf32>
    %cst_35 = arith.constant 0.000000e+00 : f32
    %79 = vector.broadcast %cst_35 : f32 to vector<1x16x1xf32>
    %80 = arith.maximumf %78, %79 : vector<1x16x1xf32>
    %81 = vector.broadcast %71 : vector<1x16x1xf32> to vector<2x16x128xf32>
    %82 = arith.subf %67, %81 : vector<2x16x128xf32>
    %cst_36 = arith.constant 9.99999974E-6 : f32
    %83 = vector.broadcast %cst_36 : f32 to vector<1x16x1xf32>
    %84 = arith.addf %80, %83 : vector<1x16x1xf32>
    %85 = math.rsqrt %84 : vector<1x16x1xf32>
    %86 = vector.broadcast %85 : vector<1x16x1xf32> to vector<2x16x128xf32>
    %87 = arith.mulf %82, %86 : vector<2x16x128xf32>
    %88 = arith.truncf %87 : vector<2x16x128xf32> to vector<2x16x128xbf16>
    "tpu.trace_start"() <{level = 10 : i32, message = "bij,bjd->bid"}> : () -> ()
    %cst_37 = arith.constant dense<0.000000e+00> : vector<2x16x128xf32>
    %89 = tpu.matmul %0, %88, %cst_37 {dimension_numbers = #tpu.dot_dimension_numbers<[2], [1], [1], [2], [0, 0, 0, 1, 1, 2], [0], [0]>} : vector<2x16x16xbf16>, vector<2x16x128xbf16>, vector<2x16x128xf32> -> vector<2x16x128xf32>
    "tpu.trace_stop"() : () -> ()
    %90 = arith.truncf %89 : vector<2x16x128xf32> to vector<2x16x128xbf16>
    %91 = vector.shape_cast %90 : vector<2x16x128xbf16> to vector<32x128xbf16>
    %c2 = arith.constant 2 : index
    %c0_38 = arith.constant 0 : index
    %c0_39 = arith.constant 0 : index
    %92 = vector.load %arg2[%c2, %c0_38, %c0_39] : memref<3x128x128xbf16, #tpu.memory_space<vmem>>, vector<1x128x128xbf16>
    %93 = vector.shape_cast %92 : vector<1x128x128xbf16> to vector<128x128xbf16>
    %cst_40 = arith.constant dense<0.000000e+00> : vector<32x128xf32>
    %94 = tpu.matmul %91, %93, %cst_40 {dimension_numbers = #tpu.dot_dimension_numbers<[1], [0], [0], [1], [0, 0, 1, 1], [], []>} : vector<32x128xbf16>, vector<128x128xbf16>, vector<32x128xf32> -> vector<32x128xf32>
    %95 = vector.shape_cast %94 : vector<32x128xf32> to vector<2x16x128xf32>
    %c2_41 = arith.constant 2 : index
    %c0_42 = arith.constant 0 : index
    %c0_43 = arith.constant 0 : index
    %96 = vector.load %arg3[%c2_41, %c0_42, %c0_43] : memref<3x1x128xf32, #tpu.memory_space<vmem>>, vector<1x1x128xf32>
    %97 = vector.shape_cast %96 : vector<1x1x128xf32> to vector<1x128xf32>
    %98 = vector.shape_cast %97 : vector<1x128xf32> to vector<1x1x128xf32>
    %99 = vector.broadcast %98 : vector<1x1x128xf32> to vector<2x16x128xf32>
    %100 = arith.addf %95, %99 : vector<2x16x128xf32>
    %101 = arith.mulf %100, %100 : vector<2x16x128xf32>
    %cst_44 = arith.constant dense<0.000000e+00> : vector<2x16xf32>
    %102 = vector.multi_reduction <add>, %101, %cst_44 [2] : vector<2x16x128xf32> to vector<2x16xf32>
    %103 = vector.shape_cast %102 : vector<2x16xf32> to vector<2x16x1xf32>
    %cst_45 = arith.constant 1.000000e-24 : f32
    %104 = vector.broadcast %cst_45 : f32 to vector<2x16x1xf32>
    %105 = arith.maximumf %103, %104 : vector<2x16x1xf32>
    %106 = math.rsqrt %105 : vector<2x16x1xf32>
    %107 = vector.broadcast %106 : vector<2x16x1xf32> to vector<2x16x128xf32>
    %108 = arith.mulf %100, %107 : vector<2x16x128xf32>
    %109 = arith.truncf %108 : vector<2x16x128xf32> to vector<2x16x128xbf16>
    %c0_46 = arith.constant 0 : index
    %c0_47 = arith.constant 0 : index
    %c0_48 = arith.constant 0 : index
    %110 = vector.load %arg4[%c0_46, %c0_47, %c0_48] : memref<2x16x128xbf16, #tpu.memory_space<vmem>>, vector<2x16x128xbf16>
    tpu.vector_store %arg4[%c0_46, %c0_47, %c0_48], %109 {strides = array<i32>} : memref<2x16x128xbf16, #tpu.memory_space<vmem>>, vector<2x16x128xbf16>,
    %cst_49 = arith.constant dense<0xFF800000> : vector<2x128xf32>
    %111 = vector.multi_reduction <maximumf>, %108, %cst_49 [1] : vector<2x16x128xf32> to vector<2x128xf32>
    %c0_50 = arith.constant 0 : index
    %c0_51 = arith.constant 0 : index
    %112 = vector.load %arg5[%c0_50, %c0_51] : memref<2x128xf32, #tpu.memory_space<vmem>>, vector<2x128xf32>
    tpu.vector_store %arg5[%c0_50, %c0_51], %111 {strides = array<i32>} : memref<2x128xf32, #tpu.memory_space<vmem>>, vector<2x128xf32>,
    return
  }
}

</mosaic_0001>

<llo_original>
// kernel: gcn_forward.1
$region0: #{gcn_forward.1}
  #allocation0 [shape = 'u32[]', space=smem, size = 0x4, offset = 0x4, fixed_abs, tag = 'smem constant byte address 0x4 - core index']
  #allocation1 [shape = 'u32[144,128]{1,0:T(1,128)}', space=vmem, size = 0x12000, scoped, tag = 'internal scratch']
  %s0 = inlined_call_operand.vmem [shape: bf16[2,16,16], index: 0, kind: input, shape index: {}]
  %s1 = inlined_call_operand.vmem [shape: f32[2,16,128], index: 1, kind: input, shape index: {}]
  %s2 = inlined_call_operand.vmem [shape: bf16[3,128,128], index: 2, kind: input, shape index: {}]
  %s3 = inlined_call_operand.vmem [shape: f32[3,1,128], index: 3, kind: input, shape index: {}]
  %s4 = inlined_call_operand.vmem [shape: bf16[2,16,128], index: 4, kind: output, shape index: {0}]
  %s5 = inlined_call_operand.hbm [shape: f32[2,128], index: 5, kind: output, shape index: {1}]
  %6 = xla_tuple %s4, %s5
  %s7 = sld [smem:[#allocation0]]
  $region34: #{gcn_forward.1} parent=0
    _
  %s9 = ssub.s32 1, %s7
  %s10 = scalar_select 0, %s9, %s7
  $region1: #{gcn_forward.1} parent=0
    #allocation2 [shape = 'u8[1024]{0}', space=vmem, size = 0x400, scoped, tag = 'output window, operand 1, single buffered']
    #allocation3 [shape = 's32[1]{0}', space=sflag, size = 0x4, scoped, tag = 'scoped memory for gcn_forward.1']
    %11 = vsyncpa [#allocation3], 0
    // Predicated region
    $region2: #{gcn_forward.1} parent=1 // pred_check
      _
    $region3: #{gcn_forward.1} parent=1 // pred_check_branch
      %13 = sbr.rel (0) target = $region5
    $region4: #{gcn_forward.1} parent=1 // pred_region
      _
    $region5: #{gcn_forward.1} parent=1 // pred_fallthru
      _
    // Predicated region
    $region6: #{gcn_forward.1} parent=1 // pred_check
      _
    $region7: #{gcn_forward.1} parent=1 // pred_check_branch
      %15 = sbr.rel (0) target = $region9
    $region8: #{gcn_forward.1} parent=1 // pred_region
      _
    $region9: #{gcn_forward.1} parent=1 // pred_fallthru
      _
    // Predicated region
    $region10: #{gcn_forward.1} parent=1 // pred_check
      _
    $region11: #{gcn_forward.1} parent=1 // pred_check_branch
      %17 = sbr.rel (0) target = $region13
    $region12: #{gcn_forward.1} parent=1 // pred_region
      _
    $region13: #{gcn_forward.1} parent=1 // pred_fallthru
      _
    // Predicated region
    $region14: #{gcn_forward.1} parent=1 // pred_check
      _
    $region15: #{gcn_forward.1} parent=1 // pred_check_branch
      %19 = sbr.rel (0) target = $region17
    $region16: #{gcn_forward.1} parent=1 // pred_region
      _
    $region17: #{gcn_forward.1} parent=1 // pred_fallthru
      _
    %v21 = vld [vmem:[%s0] sm:$0xf]
    %v22 = vld [vmem:[%s0 + $0x4] sm:$0xf]
    %v23 = vld [vmem:[%s0 + $0x8] sm:$0xf]
    %v24 = vld [vmem:[%s0 + $0xc] sm:$0xf]
    %v25 = vld [vmem:[%s1] sm:$0xff]
    %v26 = vld [vmem:[%s1 + $0x8] sm:$0xff]
    %v27 = vld [vmem:[%s1 + $0x10] sm:$0xff]
    %v28 = vld [vmem:[%s1 + $0x18] sm:$0xff]
    %v29 = vpack.c.bf16 %v26, %v25
    %v30 = vpack.c.bf16 %v28, %v27
    %v33 = vunpack.c.l.b16 %v21
    %v34 = vunpack.c.l.b16 %v22
    %v35 = vpack.c.b16 %v34, %v33
    %vm36 = vcmask 130048
    %v38 = vsel %vm36, %v35, 0
    %40 = vmatprep.subr.bf16.mxu0 0
    %41 = vmatpush1.bf16.msra.mxu0 0
    %42 = vmatprep.subr.bf16.mxu0 0
    %43 = vmatpush1.bf16.msra.mxu0 0
    %44 = vmatprep.subr.bf16.mxu0 0
    %45 = vmatpush1.bf16.msra.mxu0 0
    %46 = vmatprep.subr.bf16.mxu0 0
    %47 = vmatpush1.bf16.msra.mxu0 0
    %48 = vmatprep.subr.bf16.mxu0 0
    %49 = vmatpush1.bf16.msra.mxu0 0
    %50 = vmatprep.subr.bf16.mxu0 0
    %51 = vmatpush1.bf16.msra.mxu0 0
    %52 = vmatprep.subr.bf16.mxu0 0
    %53 = vmatpush1.bf16.msra.mxu0 0
    %54 = vmatprep.subr.bf16.mxu0 0
    %55 = vmatpush1.bf16.msra.mxu0 %v29
    %56 = vmatprep.subr.bf16.mxu0 0
    %57 = vmatpush2.bf16.msra.mxu0 0
    %58 = vmatprep.subr.bf16.mxu0 0
    %59 = vmatpush2.bf16.msra.mxu0 0
    %60 = vmatprep.subr.bf16.mxu0 0
    %61 = vmatpush2.bf16.msra.mxu0 0
    %62 = vmatprep.subr.bf16.mxu0 0
    %63 = vmatpush2.bf16.msra.mxu0 0
    %64 = vmatprep.subr.bf16.mxu0 0
    %65 = vmatpush2.bf16.msra.mxu0 0
    %66 = vmatprep.subr.bf16.mxu0 0
    %67 = vmatpush2.bf16.msra.mxu0 0
    %68 = vmatprep.subr.bf16.mxu0 0
    %69 = vmatpush2.bf16.msra.mxu0 0
    %70 = vmatprep.subr.bf16.mxu0 0
    %71 = vmatpush2.bf16.msra.mxu0 0
    %72 = vmatprep.mubr.bf16.mxu0 0
    %73 = vmatmul.mubr.bf16.gmra.mxu0 %v38
    %v74 = vpop.f32.mrf.mxu0
    %v75 = vadd.f32 0.0, %v74
    %v76 = vpop.f32.mrf.mxu0
    %v77 = vpop.f32.mrf.mxu0
    %v78 = vadd.f32 0.0, %v77
    %v79 = vpop.f32.mrf.mxu0
    %80 = vdwg.mxu0
    %v83 = vunpack.c.l.b16 %v23
    %v84 = vunpack.c.l.b16 %v24
    %v85 = vpack.c.b16 %v84, %v83
    %v87 = vsel %vm36, %v85, 0
    %89 = vmatprep.subr.bf16.mxu0 0
    %90 = vmatpush1.bf16.msra.mxu0 0
    %91 = vmatprep.subr.bf16.mxu0 0
    %92 = vmatpush1.bf16.msra.mxu0 0
    %93 = vmatprep.subr.bf16.mxu0 0
    %94 = vmatpush1.bf16.msra.mxu0 0
    %95 = vmatprep.subr.bf16.mxu0 0
    %96 = vmatpush1.bf16.msra.mxu0 0
    %97 = vmatprep.subr.bf16.mxu0 0
    %98 = vmatpush1.bf16.msra.mxu0 0
    %99 = vmatprep.subr.bf16.mxu0 0
    %100 = vmatpush1.bf16.msra.mxu0 0
    %101 = vmatprep.subr.bf16.mxu0 0
    %102 = vmatpush1.bf16.msra.mxu0 0
    %103 = vmatprep.subr.bf16.mxu0 0
    %104 = vmatpush1.bf16.msra.mxu0 %v30
    %105 = vmatprep.subr.bf16.mxu0 0
    %106 = vmatpush2.bf16.msra.mxu0 0
    %107 = vmatprep.subr.bf16.mxu0 0
    %108 = vmatpush2.bf16.msra.mxu0 0
    %109 = vmatprep.subr.bf16.mxu0 0
    %110 = vmatpush2.bf16.msra.mxu0 0
    %111 = vmatprep.subr.bf16.mxu0 0
    %112 = vmatpush2.bf16.msra.mxu0 0
    %113 = vmatprep.subr.bf16.mxu0 0
    %114 = vmatpush2.bf16.msra.mxu0 0
    %115 = vmatprep.subr.bf16.mxu0 0
    %116 = vmatpush2.bf16.msra.mxu0 0
    %117 = vmatprep.subr.bf16.mxu0 0
    %118 = vmatpush2.bf16.msra.mxu0 0
    %119 = vmatprep.subr.bf16.mxu0 0
    %120 = vmatpush2.bf16.msra.mxu0 0
    %121 = vmatprep.mubr.bf16.mxu0 0
    %122 = vmatmul.mubr.bf16.gmra.mxu0 %v87
    %v123 = vpop.f32.mrf.mxu0
    %v124 = vadd.f32 0.0, %v123
    %v125 = vpop.f32.mrf.mxu0
    %v126 = vpop.f32.mrf.mxu0
    %v127 = vadd.f32 0.0, %v126
    %v128 = vpop.f32.mrf.mxu0
    %129 = vdwg.mxu0
    %v130 = vpack.c.bf16 %v78, %v75
    %v131 = vpack.c.bf16 %v127, %v124
    %v132 = vld [vmem:[%s2] sm:$0xf]
    %v133 = vld [vmem:[%s2 + $0x4] sm:$0xf]
    %v134 = vld [vmem:[%s2 + $0x8] sm:$0xf]
    %v135 = vld [vmem:[%s2 + $0xc] sm:$0xf]
    %v136 = vld [vmem:[%s2 + $0x10] sm:$0xf]
    %v137 = vld [vmem:[%s2 + $0x14] sm:$0xf]
    %v138 = vld [vmem:[%s2 + $0x18] sm:$0xf]
    %v139 = vld [vmem:[%s2 + $0x1c] sm:$0xf]
    %v140 = vld [vmem:[%s2 + $0x20] sm:$0xf]
    %v141 = vld [vmem:[%s2 + $0x24] sm:$0xf]
    %v142 = vld [vmem:[%s2 + $0x28] sm:$0xf]
    %v143 = vld [vmem:[%s2 + $0x2c] sm:$0xf]
    %v144 = vld [vmem:[%s2 + $0x30] sm:$0xf]
    %v145 = vld [vmem:[%s2 + $0x34] sm:$0xf]
    %v146 = vld [vmem:[%s2 + $0x38] sm:$0xf]
    %v147 = vld [vmem:[%s2 + $0x3c] sm:$0xf]
    %v164 = vunpack.c.l.b16 %v132
    %v165 = vunpack.c.l.b16 %v133
    %v166 = vunpack.c.l.b16 %v134
    %v167 = vunpack.c.l.b16 %v135
    %v168 = vunpack.c.l.b16 %v136
    %v169 = vunpack.c.l.b16 %v137
    %v170 = vunpack.c.l.b16 %v138
    %v171 = vunpack.c.l.b16 %v139
    %v172 = vunpack.c.l.b16 %v140
    %v173 = vunpack.c.l.b16 %v141
    %v174 = vunpack.c.l.b16 %v142
    %v175 = vunpack.c.l.b16 %v143
    %v176 = vunpack.c.l.b16 %v144
    %v177 = vunpack.c.l.b16 %v145
    %v178 = vunpack.c.l.b16 %v146
    %v179 = vunpack.c.l.b16 %v147
    %v180 = vpack.c.b16 %v165, %v164
    %v181 = vpack.c.b16 %v167, %v166
    %v182 = vpack.c.b16 %v169, %v168
    %v183 = vpack.c.b16 %v171, %v170
    %v184 = vpack.c.b16 %v173, %v172
    %v185 = vpack.c.b16 %v175, %v174
    %v186 = vpack.c.b16 %v177, %v176
    %v187 = vpack.c.b16 %v179, %v178
    %196 = vmatprep.subr.bf16.mxu0 0
    %197 = vmatpush1.bf16.msra.mxu0 %v187
    %198 = vmatprep.subr.bf16.mxu0 0
    %199 = vmatpush1.bf16.msra.mxu0 %v186
    %200 = vmatprep.subr.bf16.mxu0 0
    %201 = vmatpush1.bf16.msra.mxu0 %v185
    %202 = vmatprep.subr.bf16.mxu0 0
    %203 = vmatpush1.bf16.msra.mxu0 %v184
    %204 = vmatprep.subr.bf16.mxu0 0
    %205 = vmatpush1.bf16.msra.mxu0 %v183
    %206 = vmatprep.subr.bf16.mxu0 0
    %207 = vmatpush1.bf16.msra.mxu0 %v182
    %208 = vmatprep.subr.bf16.mxu0 0
    %209 = vmatpush1.bf16.msra.mxu0 %v181
    %210 = vmatprep.subr.bf16.mxu0 0
    %211 = vmatpush1.bf16.msra.mxu0 %v180
    %212 = vmatprep.subr.bf16.mxu0 0
    %213 = vmatpush2.bf16.msra.mxu0 0
    %214 = vmatprep.subr.bf16.mxu0 0
    %215 = vmatpush2.bf16.msra.mxu0 0
    %216 = vmatprep.subr.bf16.mxu0 0
    %217 = vmatpush2.bf16.msra.mxu0 0
    %218 = vmatprep.subr.bf16.mxu0 0
    %219 = vmatpush2.bf16.msra.mxu0 0
    %220 = vmatprep.subr.bf16.mxu0 0
    %221 = vmatpush2.bf16.msra.mxu0 0
    %222 = vmatprep.subr.bf16.mxu0 0
    %223 = vmatpush2.bf16.msra.mxu0 0
    %224 = vmatprep.subr.bf16.mxu0 0
    %225 = vmatpush2.bf16.msra.mxu0 0
    %226 = vmatprep.subr.bf16.mxu0 0
    %227 = vmatpush2.bf16.msra.mxu0 0
    %228 = vmatprep.mubr.bf16.mxu0 0
    %229 = vmatmul.mubr.bf16.gmra.mxu0 %v130
    %v230 = vpop.f32.mrf.mxu0
    %v231 = vadd.f32 0.0, %v230
    %v232 = vpop.f32.mrf.mxu0
    %v233 = vpop.f32.mrf.mxu0
    %v234 = vadd.f32 0.0, %v233
    %v235 = vpop.f32.mrf.mxu0
    %236 = vmatprep.mubr.bf16.mxu0 0
    %237 = vmatmul.mubr.bf16.gmra.mxu0 %v131
    %v238 = vpop.f32.mrf.mxu0
    %v239 = vadd.f32 0.0, %v238
    %v240 = vpop.f32.mrf.mxu0
    %v241 = vpop.f32.mrf.mxu0
    %v242 = vadd.f32 0.0, %v241
    %v243 = vpop.f32.mrf.mxu0
    %244 = vdwg.mxu0
    %v245 = vld [vmem:[%s3] sm:$0x1]
    %v247 = vlaneseq
    %v248 = vshrl.u32 %v247, 7
    %v249 = vsub.s32 0, %v248
    %v250 = vrot.slane %v245, %v249
    %v252 = vadd.f32 %v231, %v250
    %v253 = vadd.f32 %v234, %v250
    %v254 = vadd.f32 %v239, %v250
    %v255 = vadd.f32 %v242, %v250
    %v256 = vmul.f32 %v252, %v252
    %v257 = vmul.f32 %v253, %v253
    %v258 = vmul.f32 %v254, %v254
    %v259 = vmul.f32 %v255, %v255
    %260 = vadd.xlane.f32.xlu0 %v256
    %v261 = vpop.xlane.xlu0 %260
    %262 = vadd.xlane.f32.xlu0 %v257
    %v263 = vpop.xlane.xlu0 %262
    %264 = vadd.xlane.f32.xlu0 %v258
    %v265 = vpop.xlane.xlu0 %264
    %266 = vadd.xlane.f32.xlu0 %v259
    %v267 = vpop.xlane.xlu0 %266
    %v268 = vmax.f32 %v261, 1e-24
    %v269 = vmax.f32 %v263, 1e-24
    %v270 = vmax.f32 %v265, 1e-24
    %v271 = vmax.f32 %v267, 1e-24
    %v272 = vrsqrt.pop %v268
    %v273 = vrsqrt.pop %v269
    %v274 = vrsqrt.pop %v270
    %v275 = vrsqrt.pop %v271
    %v276 = vmul.f32 %v252, %v272
    %v277 = vmul.f32 %v253, %v273
    %v278 = vmul.f32 %v254, %v274
    %v279 = vmul.f32 %v255, %v275
    %v280 = vmax.f32 %v276, 0.0
    %v281 = vmax.f32 %v277, 0.0
    %v282 = vmax.f32 %v278, 0.0
    %v283 = vmax.f32 %v279, 0.0
    %v284 = vadd.f32 %v280, %v282
    %285 = vadd.xlane.f32.xlu0 %v284
    %v286 = vpop.xlane.xlu0 %285
    %v287 = vadd.f32 %v281, %v283
    %288 = vadd.xlane.f32.xlu0 %v287
    %v289 = vpop.xlane.xlu0 %288
    %v290 = vmul.f32 %v286, 0.03125
    %v291 = vmul.f32 %v289, 0.03125
    %v292 = vmul.f32 %v280, %v280
    %v293 = vmul.f32 %v281, %v281
    %v294 = vmul.f32 %v282, %v282
    %v295 = vmul.f32 %v283, %v283
    %v296 = vadd.f32 %v292, %v294
    %297 = vadd.xlane.f32.xlu0 %v296
    %v298 = vpop.xlane.xlu0 %297
    %v299 = vadd.f32 %v293, %v295
    %300 = vadd.xlane.f32.xlu0 %v299
    %v301 = vpop.xlane.xlu0 %300
    %v302 = vmul.f32 %v298, 0.03125
    %v303 = vmul.f32 %v301, 0.03125
    %v304 = vmul.f32 %v290, %v290
    %v305 = vmul.f32 %v291, %v291
    %v306 = vsub.f32 %v302, %v304
    %v307 = vsub.f32 %v303, %v305
    %v308 = vmax.f32 %v306, 0.0
    %v309 = vmax.f32 %v307, 0.0
    %v310 = vsub.f32 %v280, %v290
    %v311 = vsub.f32 %v281, %v291
    %v312 = vsub.f32 %v282, %v290
    %v313 = vsub.f32 %v283, %v291
    %v314 = vadd.f32 %v308, 1e-05
    %v315 = vadd.f32 %v309, 1e-05
    %v316 = vrsqrt.pop %v314
    %v317 = vrsqrt.pop %v315
    %v318 = vmul.f32 %v310, %v316
    %v319 = vmul.f32 %v311, %v317
    %v320 = vmul.f32 %v312, %v316
    %v321 = vmul.f32 %v313, %v317
    %v322 = vpack.c.bf16 %v319, %v318
    %v323 = vpack.c.bf16 %v321, %v320
    %324 = vmatprep.subr.bf16.mxu0 0
    %325 = vmatpush1.bf16.msra.mxu0 0
    %326 = vmatprep.subr.bf16.mxu0 0
    %327 = vmatpush1.bf16.msra.mxu0 0
    %328 = vmatprep.subr.bf16.mxu0 0
    %329 = vmatpush1.bf16.msra.mxu0 0
    %330 = vmatprep.subr.bf16.mxu0 0
    %331 = vmatpush1.bf16.msra.mxu0 0
    %332 = vmatprep.subr.bf16.mxu0 0
    %333 = vmatpush1.bf16.msra.mxu0 0
    %334 = vmatprep.subr.bf16.mxu0 0
    %335 = vmatpush1.bf16.msra.mxu0 0
    %336 = vmatprep.subr.bf16.mxu0 0
    %337 = vmatpush1.bf16.msra.mxu0 0
    %338 = vmatprep.subr.bf16.mxu0 0
    %339 = vmatpush1.bf16.msra.mxu0 %v322
    %340 = vmatprep.subr.bf16.mxu0 0
    %341 = vmatpush2.bf16.msra.mxu0 0
    %342 = vmatprep.subr.bf16.mxu0 0
    %343 = vmatpush2.bf16.msra.mxu0 0
    %344 = vmatprep.subr.bf16.mxu0 0
    %345 = vmatpush2.bf16.msra.mxu0 0
    %346 = vmatprep.subr.bf16.mxu0 0
    %347 = vmatpush2.bf16.msra.mxu0 0
    %348 = vmatprep.subr.bf16.mxu0 0
    %349 = vmatpush2.bf16.msra.mxu0 0
    %350 = vmatprep.subr.bf16.mxu0 0
    %351 = vmatpush2.bf16.msra.mxu0 0
    %352 = vmatprep.subr.bf16.mxu0 0
    %353 = vmatpush2.bf16.msra.mxu0 0
    %354 = vmatprep.subr.bf16.mxu0 0
    %355 = vmatpush2.bf16.msra.mxu0 0
    %356 = vmatprep.mubr.bf16.mxu0 0
    %357 = vmatmul.mubr.bf16.gmra.mxu0 %v38
    %v358 = vpop.f32.mrf.mxu0
    %v359 = vadd.f32 0.0, %v358
    %v360 = vpop.f32.mrf.mxu0
    %v361 = vpop.f32.mrf.mxu0
    %v362 = vadd.f32 0.0, %v361
    %v363 = vpop.f32.mrf.mxu0
    %364 = vdwg.mxu0
    %365 = vmatprep.subr.bf16.mxu0 0
    %366 = vmatpush1.bf16.msra.mxu0 0
    %367 = vmatprep.subr.bf16.mxu0 0
    %368 = vmatpush1.bf16.msra.mxu0 0
    %369 = vmatprep.subr.bf16.mxu0 0
    %370 = vmatpush1.bf16.msra.mxu0 0
    %371 = vmatprep.subr.bf16.mxu0 0
    %372 = vmatpush1.bf16.msra.mxu0 0
    %373 = vmatprep.subr.bf16.mxu0 0
    %374 = vmatpush1.bf16.msra.mxu0 0
    %375 = vmatprep.subr.bf16.mxu0 0
    %376 = vmatpush1.bf16.msra.mxu0 0
    %377 = vmatprep.subr.bf16.mxu0 0
    %378 = vmatpush1.bf16.msra.mxu0 0
    %379 = vmatprep.subr.bf16.mxu0 0
    %380 = vmatpush1.bf16.msra.mxu0 %v323
    %381 = vmatprep.subr.bf16.mxu0 0
    %382 = vmatpush2.bf16.msra.mxu0 0
    %383 = vmatprep.subr.bf16.mxu0 0
    %384 = vmatpush2.bf16.msra.mxu0 0
    %385 = vmatprep.subr.bf16.mxu0 0
    %386 = vmatpush2.bf16.msra.mxu0 0
    %387 = vmatprep.subr.bf16.mxu0 0
    %388 = vmatpush2.bf16.msra.mxu0 0
    %389 = vmatprep.subr.bf16.mxu0 0
    %390 = vmatpush2.bf16.msra.mxu0 0
    %391 = vmatprep.subr.bf16.mxu0 0
    %392 = vmatpush2.bf16.msra.mxu0 0
    %393 = vmatprep.subr.bf16.mxu0 0
    %394 = vmatpush2.bf16.msra.mxu0 0
    %395 = vmatprep.subr.bf16.mxu0 0
    %396 = vmatpush2.bf16.msra.mxu0 0
    %397 = vmatprep.mubr.bf16.mxu0 0
    %398 = vmatmul.mubr.bf16.gmra.mxu0 %v87
    %v399 = vpop.f32.mrf.mxu0
    %v400 = vadd.f32 0.0, %v399
    %v401 = vpop.f32.mrf.mxu0
    %v402 = vpop.f32.mrf.mxu0
    %v403 = vadd.f32 0.0, %v402
    %v404 = vpop.f32.mrf.mxu0
    %405 = vdwg.mxu0
    %v406 = vpack.c.bf16 %v362, %v359
    %v407 = vpack.c.bf16 %v403, %v400
    %s408 = scalar_lea.vmem %s2, 64
    %v409 = vld [vmem:[%s408] sm:$0xf]
    %v410 = vld [vmem:[%s408 + $0x4] sm:$0xf]
    %v411 = vld [vmem:[%s408 + $0x8] sm:$0xf]
    %v412 = vld [vmem:[%s408 + $0xc] sm:$0xf]
    %v413 = vld [vmem:[%s408 + $0x10] sm:$0xf]
    %v414 = vld [vmem:[%s408 + $0x14] sm:$0xf]
    %v415 = vld [vmem:[%s408 + $0x18] sm:$0xf]
    %v416 = vld [vmem:[%s408 + $0x1c] sm:$0xf]
    %v417 = vld [vmem:[%s408 + $0x20] sm:$0xf]
    %v418 = vld [vmem:[%s408 + $0x24] sm:$0xf]
    %v419 = vld [vmem:[%s408 + $0x28] sm:$0xf]
    %v420 = vld [vmem:[%s408 + $0x2c] sm:$0xf]
    %v421 = vld [vmem:[%s408 + $0x30] sm:$0xf]
    %v422 = vld [vmem:[%s408 + $0x34] sm:$0xf]
    %v423 = vld [vmem:[%s408 + $0x38] sm:$0xf]
    %v424 = vld [vmem:[%s408 + $0x3c] sm:$0xf]
    %v441 = vunpack.c.l.b16 %v409
    %v442 = vunpack.c.l.b16 %v410
    %v443 = vunpack.c.l.b16 %v411
    %v444 = vunpack.c.l.b16 %v412
    %v445 = vunpack.c.l.b16 %v413
    %v446 = vunpack.c.l.b16 %v414
    %v447 = vunpack.c.l.b16 %v415
    %v448 = vunpack.c.l.b16 %v416
    %v449 = vunpack.c.l.b16 %v417
    %v450 = vunpack.c.l.b16 %v418
    %v451 = vunpack.c.l.b16 %v419
    %v452 = vunpack.c.l.b16 %v420
    %v453 = vunpack.c.l.b16 %v421
    %v454 = vunpack.c.l.b16 %v422
    %v455 = vunpack.c.l.b16 %v423
    %v456 = vunpack.c.l.b16 %v424
    %v457 = vpack.c.b16 %v442, %v441
    %v458 = vpack.c.b16 %v444, %v443
    %v459 = vpack.c.b16 %v446, %v445
    %v460 = vpack.c.b16 %v448, %v447
    %v461 = vpack.c.b16 %v450, %v449
    %v462 = vpack.c.b16 %v452, %v451
    %v463 = vpack.c.b16 %v454, %v453
    %v464 = vpack.c.b16 %v456, %v455
    %473 = vmatprep.subr.bf16.mxu0 0
    %474 = vmatpush1.bf16.msra.mxu0 %v464
    %475 = vmatprep.subr.bf16.mxu0 0
    %476 = vmatpush1.bf16.msra.mxu0 %v463
    %477 = vmatprep.subr.bf16.mxu0 0
    %478 = vmatpush1.bf16.msra.mxu0 %v462
    %479 = vmatprep.subr.bf16.mxu0 0
    %480 = vmatpush1.bf16.msra.mxu0 %v461
    %481 = vmatprep.subr.bf16.mxu0 0
    %482 = vmatpush1.bf16.msra.mxu0 %v460
    %483 = vmatprep.subr.bf16.mxu0 0
    %484 = vmatpush1.bf16.msra.mxu0 %v459
    %485 = vmatprep.subr.bf16.mxu0 0
    %486 = vmatpush1.bf16.msra.mxu0 %v458
    %487 = vmatprep.subr.bf16.mxu0 0
    %488 = vmatpush1.bf16.msra.mxu0 %v457
    %489 = vmatprep.subr.bf16.mxu0 0
    %490 = vmatpush2.bf16.msra.mxu0 0
    %491 = vmatprep.subr.bf16.mxu0 0
    %492 = vmatpush2.bf16.msra.mxu0 0
    %493 = vmatprep.subr.bf16.mxu0 0
    %494 = vmatpush2.bf16.msra.mxu0 0
    %495 = vmatprep.subr.bf16.mxu0 0
    %496 = vmatpush2.bf16.msra.mxu0 0
    %497 = vmatprep.subr.bf16.mxu0 0
    %498 = vmatpush2.bf16.msra.mxu0 0
    %499 = vmatprep.subr.bf16.mxu0 0
    %500 = vmatpush2.bf16.msra.mxu0 0
    %501 = vmatprep.subr.bf16.mxu0 0
    %502 = vmatpush2.bf16.msra.mxu0 0
    %503 = vmatprep.subr.bf16.mxu0 0
    %504 = vmatpush2.bf16.msra.mxu0 0
    %505 = vmatprep.mubr.bf16.mxu0 0
    %506 = vmatmul.mubr.bf16.gmra.mxu0 %v406
    %v507 = vpop.f32.mrf.mxu0
    %v508 = vadd.f32 0.0, %v507
    %v509 = vpop.f32.mrf.mxu0
    %v510 = vpop.f32.mrf.mxu0
    %v511 = vadd.f32 0.0, %v510
    %v512 = vpop.f32.mrf.mxu0
    %513 = vmatprep.mubr.bf16.mxu0 0
    %514 = vmatmul.mubr.bf16.gmra.mxu0 %v407
    %v515 = vpop.f32.mrf.mxu0
    %v516 = vadd.f32 0.0, %v515
    %v517 = vpop.f32.mrf.mxu0
    %v518 = vpop.f32.mrf.mxu0
    %v519 = vadd.f32 0.0, %v518
    %v520 = vpop.f32.mrf.mxu0
    %521 = vdwg.mxu0
    %s522 = scalar_lea.vmem %s3, 1
    %v523 = vld [vmem:[%s522] sm:$0x1]
    %v525 = vlaneseq
    %v526 = vshrl.u32 %v525, 7
    %v527 = vsub.s32 0, %v526
    %v528 = vrot.slane %v523, %v527
    %v530 = vadd.f32 %v508, %v528
    %v531 = vadd.f32 %v511, %v528
    %v532 = vadd.f32 %v516, %v528
    %v533 = vadd.f32 %v519, %v528
    %v534 = vmul.f32 %v530, %v530
    %v535 = vmul.f32 %v531, %v531
    %v536 = vmul.f32 %v532, %v532
    %v537 = vmul.f32 %v533, %v533
    %538 = vadd.xlane.f32.xlu0 %v534
    %v539 = vpop.xlane.xlu0 %538
    %540 = vadd.xlane.f32.xlu0 %v535
    %v541 = vpop.xlane.xlu0 %540
    %542 = vadd.xlane.f32.xlu0 %v536
    %v543 = vpop.xlane.xlu0 %542
    %544 = vadd.xlane.f32.xlu0 %v537
    %v545 = vpop.xlane.xlu0 %544
    %v546 = vmax.f32 %v539, 1e-24
    %v547 = vmax.f32 %v541, 1e-24
    %v548 = vmax.f32 %v543, 1e-24
    %v549 = vmax.f32 %v545, 1e-24
    %v550 = vrsqrt.pop %v546
    %v551 = vrsqrt.pop %v547
    %v552 = vrsqrt.pop %v548
    %v553 = vrsqrt.pop %v549
    %v554 = vmul.f32 %v530, %v550
    %v555 = vmul.f32 %v531, %v551
    %v556 = vmul.f32 %v532, %v552
    %v557 = vmul.f32 %v533, %v553
    %v558 = vmax.f32 %v554, 0.0
    %v559 = vmax.f32 %v555, 0.0
    %v560 = vmax.f32 %v556, 0.0
    %v561 = vmax.f32 %v557, 0.0
    %v562 = vadd.f32 %v558, %v560
    %563 = vadd.xlane.f32.xlu0 %v562
    %v564 = vpop.xlane.xlu0 %563
    %v565 = vadd.f32 %v559, %v561
    %566 = vadd.xlane.f32.xlu0 %v565
    %v567 = vpop.xlane.xlu0 %566
    %v568 = vmul.f32 %v564, 0.03125
    %v569 = vmul.f32 %v567, 0.03125
    %v570 = vmul.f32 %v558, %v558
    %v571 = vmul.f32 %v559, %v559
    %v572 = vmul.f32 %v560, %v560
    %v573 = vmul.f32 %v561, %v561
    %v574 = vadd.f32 %v570, %v572
    %575 = vadd.xlane.f32.xlu0 %v574
    %v576 = vpop.xlane.xlu0 %575
    %v577 = vadd.f32 %v571, %v573
    %578 = vadd.xlane.f32.xlu0 %v577
    %v579 = vpop.xlane.xlu0 %578
    %v580 = vmul.f32 %v576, 0.03125
    %v581 = vmul.f32 %v579, 0.03125
    %v582 = vmul.f32 %v568, %v568
    %v583 = vmul.f32 %v569, %v569
    %v584 = vsub.f32 %v580, %v582
    %v585 = vsub.f32 %v581, %v583
    %v586 = vmax.f32 %v584, 0.0
    %v587 = vmax.f32 %v585, 0.0
    %v588 = vsub.f32 %v558, %v568
    %v589 = vsub.f32 %v559, %v569
    %v590 = vsub.f32 %v560, %v568
    %v591 = vsub.f32 %v561, %v569
    %v592 = vadd.f32 %v586, 1e-05
    %v593 = vadd.f32 %v587, 1e-05
    %v594 = vrsqrt.pop %v592
    %v595 = vrsqrt.pop %v593
    %v596 = vmul.f32 %v588, %v594
    %v597 = vmul.f32 %v589, %v595
    %v598 = vmul.f32 %v590, %v594
    %v599 = vmul.f32 %v591, %v595
    %v600 = vpack.c.bf16 %v597, %v596
    %v601 = vpack.c.bf16 %v599, %v598
    %602 = vmatprep.subr.bf16.mxu0 0
    %603 = vmatpush1.bf16.msra.mxu0 0
    %604 = vmatprep.subr.bf16.mxu0 0
    %605 = vmatpush1.bf16.msra.mxu0 0
    %606 = vmatprep.subr.bf16.mxu0 0
    %607 = vmatpush1.bf16.msra.mxu0 0
    %608 = vmatprep.subr.bf16.mxu0 0
    %609 = vmatpush1.bf16.msra.mxu0 0
    %610 = vmatprep.subr.bf16.mxu0 0
    %611 = vmatpush1.bf16.msra.mxu0 0
    %612 = vmatprep.subr.bf16.mxu0 0
    %613 = vmatpush1.bf16.msra.mxu0 0
    %614 = vmatprep.subr.bf16.mxu0 0
    %615 = vmatpush1.bf16.msra.mxu0 0
    %616 = vmatprep.subr.bf16.mxu0 0
    %617 = vmatpush1.bf16.msra.mxu0 %v600
    %618 = vmatprep.subr.bf16.mxu0 0
    %619 = vmatpush2.bf16.msra.mxu0 0
    %620 = vmatprep.subr.bf16.mxu0 0
    %621 = vmatpush2.bf16.msra.mxu0 0
    %622 = vmatprep.subr.bf16.mxu0 0
    %623 = vmatpush2.bf16.msra.mxu0 0
    %624 = vmatprep.subr.bf16.mxu0 0
    %625 = vmatpush2.bf16.msra.mxu0 0
    %626 = vmatprep.subr.bf16.mxu0 0
    %627 = vmatpush2.bf16.msra.mxu0 0
    %628 = vmatprep.subr.bf16.mxu0 0
    %629 = vmatpush2.bf16.msra.mxu0 0
    %630 = vmatprep.subr.bf16.mxu0 0
    %631 = vmatpush2.bf16.msra.mxu0 0
    %632 = vmatprep.subr.bf16.mxu0 0
    %633 = vmatpush2.bf16.msra.mxu0 0
    %634 = vmatprep.mubr.bf16.mxu0 0
    %635 = vmatmul.mubr.bf16.gmra.mxu0 %v38
    %v636 = vpop.f32.mrf.mxu0
    %v637 = vadd.f32 0.0, %v636
    %v638 = vpop.f32.mrf.mxu0
    %v639 = vpop.f32.mrf.mxu0
    %v640 = vadd.f32 0.0, %v639
    %v641 = vpop.f32.mrf.mxu0
    %642 = vdwg.mxu0
    %643 = vmatprep.subr.bf16.mxu0 0
    %644 = vmatpush1.bf16.msra.mxu0 0
    %645 = vmatprep.subr.bf16.mxu0 0
    %646 = vmatpush1.bf16.msra.mxu0 0
    %647 = vmatprep.subr.bf16.mxu0 0
    %648 = vmatpush1.bf16.msra.mxu0 0
    %649 = vmatprep.subr.bf16.mxu0 0
    %650 = vmatpush1.bf16.msra.mxu0 0
    %651 = vmatprep.subr.bf16.mxu0 0
    %652 = vmatpush1.bf16.msra.mxu0 0
    %653 = vmatprep.subr.bf16.mxu0 0
    %654 = vmatpush1.bf16.msra.mxu0 0
    %655 = vmatprep.subr.bf16.mxu0 0
    %656 = vmatpush1.bf16.msra.mxu0 0
    %657 = vmatprep.subr.bf16.mxu0 0
    %658 = vmatpush1.bf16.msra.mxu0 %v601
    %659 = vmatprep.subr.bf16.mxu0 0
    %660 = vmatpush2.bf16.msra.mxu0 0
    %661 = vmatprep.subr.bf16.mxu0 0
    %662 = vmatpush2.bf16.msra.mxu0 0
    %663 = vmatprep.subr.bf16.mxu0 0
    %664 = vmatpush2.bf16.msra.mxu0 0
    %665 = vmatprep.subr.bf16.mxu0 0
    %666 = vmatpush2.bf16.msra.mxu0 0
    %667 = vmatprep.subr.bf16.mxu0 0
    %668 = vmatpush2.bf16.msra.mxu0 0
    %669 = vmatprep.subr.bf16.mxu0 0
    %670 = vmatpush2.bf16.msra.mxu0 0
    %671 = vmatprep.subr.bf16.mxu0 0
    %672 = vmatpush2.bf16.msra.mxu0 0
    %673 = vmatprep.subr.bf16.mxu0 0
    %674 = vmatpush2.bf16.msra.mxu0 0
    %675 = vmatprep.mubr.bf16.mxu0 0
    %676 = vmatmul.mubr.bf16.gmra.mxu0 %v87
    %v677 = vpop.f32.mrf.mxu0
    %v678 = vadd.f32 0.0, %v677
    %v679 = vpop.f32.mrf.mxu0
    %v680 = vpop.f32.mrf.mxu0
    %v681 = vadd.f32 0.0, %v680
    %v682 = vpop.f32.mrf.mxu0
    %683 = vdwg.mxu0
    %v684 = vpack.c.bf16 %v640, %v637
    %v685 = vpack.c.bf16 %v681, %v678
    %s686 = scalar_lea.vmem %s2, 128
    %v687 = vld [vmem:[%s686] sm:$0xf]
    %v688 = vld [vmem:[%s686 + $0x4] sm:$0xf]
    %v689 = vld [vmem:[%s686 + $0x8] sm:$0xf]
    %v690 = vld [vmem:[%s686 + $0xc] sm:$0xf]
    %v691 = vld [vmem:[%s686 + $0x10] sm:$0xf]
    %v692 = vld [vmem:[%s686 + $0x14] sm:$0xf]
    %v693 = vld [vmem:[%s686 + $0x18] sm:$0xf]
    %v694 = vld [vmem:[%s686 + $0x1c] sm:$0xf]
    %v695 = vld [vmem:[%s686 + $0x20] sm:$0xf]
    %v696 = vld [vmem:[%s686 + $0x24] sm:$0xf]
    %v697 = vld [vmem:[%s686 + $0x28] sm:$0xf]
    %v698 = vld [vmem:[%s686 + $0x2c] sm:$0xf]
    %v699 = vld [vmem:[%s686 + $0x30] sm:$0xf]
    %v700 = vld [vmem:[%s686 + $0x34] sm:$0xf]
    %v701 = vld [vmem:[%s686 + $0x38] sm:$0xf]
    %v702 = vld [vmem:[%s686 + $0x3c] sm:$0xf]
    %v719 = vunpack.c.l.b16 %v687
    %v720 = vunpack.c.l.b16 %v688
    %v721 = vunpack.c.l.b16 %v689
    %v722 = vunpack.c.l.b16 %v690
    %v723 = vunpack.c.l.b16 %v691
    %v724 = vunpack.c.l.b16 %v692
    %v725 = vunpack.c.l.b16 %v693
    %v726 = vunpack.c.l.b16 %v694
    %v727 = vunpack.c.l.b16 %v695
    %v728 = vunpack.c.l.b16 %v696
    %v729 = vunpack.c.l.b16 %v697
    %v730 = vunpack.c.l.b16 %v698
    %v731 = vunpack.c.l.b16 %v699
    %v732 = vunpack.c.l.b16 %v700
    %v733 = vunpack.c.l.b16 %v701
    %v734 = vunpack.c.l.b16 %v702
    %v735 = vpack.c.b16 %v720, %v719
    %v736 = vpack.c.b16 %v722, %v721
    %v737 = vpack.c.b16 %v724, %v723
    %v738 = vpack.c.b16 %v726, %v725
    %v739 = vpack.c.b16 %v728, %v727
    %v740 = vpack.c.b16 %v730, %v729
    %v741 = vpack.c.b16 %v732, %v731
    %v742 = vpack.c.b16 %v734, %v733
    %751 = vmatprep.subr.bf16.mxu0 0
    %752 = vmatpush1.bf16.msra.mxu0 %v742
    %753 = vmatprep.subr.bf16.mxu0 0
    %754 = vmatpush1.bf16.msra.mxu0 %v741
    %755 = vmatprep.subr.bf16.mxu0 0
    %756 = vmatpush1.bf16.msra.mxu0 %v740
    %757 = vmatprep.subr.bf16.mxu0 0
    %758 = vmatpush1.bf16.msra.mxu0 %v739
    %759 = vmatprep.subr.bf16.mxu0 0
    %760 = vmatpush1.bf16.msra.mxu0 %v738
    %761 = vmatprep.subr.bf16.mxu0 0
    %762 = vmatpush1.bf16.msra.mxu0 %v737
    %763 = vmatprep.subr.bf16.mxu0 0
    %764 = vmatpush1.bf16.msra.mxu0 %v736
    %765 = vmatprep.subr.bf16.mxu0 0
    %766 = vmatpush1.bf16.msra.mxu0 %v735
    %767 = vmatprep.subr.bf16.mxu0 0
    %768 = vmatpush2.bf16.msra.mxu0 0
    %769 = vmatprep.subr.bf16.mxu0 0
    %770 = vmatpush2.bf16.msra.mxu0 0
    %771 = vmatprep.subr.bf16.mxu0 0
    %772 = vmatpush2.bf16.msra.mxu0 0
    %773 = vmatprep.subr.bf16.mxu0 0
    %774 = vmatpush2.bf16.msra.mxu0 0
    %775 = vmatprep.subr.bf16.mxu0 0
    %776 = vmatpush2.bf16.msra.mxu0 0
    %777 = vmatprep.subr.bf16.mxu0 0
    %778 = vmatpush2.bf16.msra.mxu0 0
    %779 = vmatprep.subr.bf16.mxu0 0
    %780 = vmatpush2.bf16.msra.mxu0 0
    %781 = vmatprep.subr.bf16.mxu0 0
    %782 = vmatpush2.bf16.msra.mxu0 0
    %783 = vmatprep.mubr.bf16.mxu0 0
    %784 = vmatmul.mubr.bf16.gmra.mxu0 %v684
    %v785 = vpop.f32.mrf.mxu0
    %v786 = vadd.f32 0.0, %v785
    %v787 = vpop.f32.mrf.mxu0
    %v788 = vpop.f32.mrf.mxu0
    %v789 = vadd.f32 0.0, %v788
    %v790 = vpop.f32.mrf.mxu0
    %791 = vmatprep.mubr.bf16.mxu0 0
    %792 = vmatmul.mubr.bf16.gmra.mxu0 %v685
    %v793 = vpop.f32.mrf.mxu0
    %v794 = vadd.f32 0.0, %v793
    %v795 = vpop.f32.mrf.mxu0
    %v796 = vpop.f32.mrf.mxu0
    %v797 = vadd.f32 0.0, %v796
    %v798 = vpop.f32.mrf.mxu0
    %799 = vdwg.mxu0
    %s800 = scalar_lea.vmem %s3, 2
    %v801 = vld [vmem:[%s800] sm:$0x1]
    %v803 = vlaneseq
    %v804 = vshrl.u32 %v803, 7
    %v805 = vsub.s32 0, %v804
    %v806 = vrot.slane %v801, %v805
    %v808 = vadd.f32 %v786, %v806
    %v809 = vadd.f32 %v789, %v806
    %v810 = vadd.f32 %v794, %v806
    %v811 = vadd.f32 %v797, %v806
    %v812 = vmul.f32 %v808, %v808
    %v813 = vmul.f32 %v809, %v809
    %v814 = vmul.f32 %v810, %v810
    %v815 = vmul.f32 %v811, %v811
    %816 = vadd.xlane.f32.xlu0 %v812
    %v817 = vpop.xlane.xlu0 %816
    %818 = vadd.xlane.f32.xlu0 %v813
    %v819 = vpop.xlane.xlu0 %818
    %820 = vadd.xlane.f32.xlu0 %v814
    %v821 = vpop.xlane.xlu0 %820
    %822 = vadd.xlane.f32.xlu0 %v815
    %v823 = vpop.xlane.xlu0 %822
    %v824 = vmax.f32 %v817, 1e-24
    %v825 = vmax.f32 %v819, 1e-24
    %v826 = vmax.f32 %v821, 1e-24
    %v827 = vmax.f32 %v823, 1e-24
    %v828 = vrsqrt.pop %v824
    %v829 = vrsqrt.pop %v825
    %v830 = vrsqrt.pop %v826
    %v831 = vrsqrt.pop %v827
    %v832 = vmul.f32 %v808, %v828
    %v833 = vmul.f32 %v809, %v829
    %v834 = vmul.f32 %v810, %v830
    %v835 = vmul.f32 %v811, %v831
    %v836 = vpack.c.bf16 %v833, %v832
    %v837 = vpack.c.bf16 %v835, %v834
    %v840 = vunpack.c.l.b16 %v836
    %v841 = vunpack.c.h.b16 %v836
    %v842 = vunpack.c.l.b16 %v837
    %v843 = vunpack.c.h.b16 %v837
    %v844 = vpack.c.b16 %v840, %v840
    %v845 = vpack.c.b16 %v841, %v841
    %v846 = vpack.c.b16 %v842, %v842
    %v847 = vpack.c.b16 %v843, %v843
    %852 = vst [vmem:[%s4] sm:$0xf] %v844
    %853 = vst [vmem:[%s4 + $0x4] sm:$0xf] %v845
    %854 = vst [vmem:[%s4 + $0x8] sm:$0xf] %v846
    %855 = vst [vmem:[%s4 + $0xc] sm:$0xf] %v847
    %v856 = vmax.f32 %v832, %v833
    %v857 = vrot.slane %v856, 4
    %v858 = vmax.f32 %v856, %v857
    %v859 = vrot.slane %v858, 2
    %v860 = vmax.f32 %v858, %v859
    %v861 = vrot.slane %v860, 1
    %v862 = vmax.f32 %v860, %v861
    %v863 = vmax.f32 %v834, %v835
    %v864 = vrot.slane %v863, 4
    %v865 = vmax.f32 %v863, %v864
    %v866 = vrot.slane %v865, 2
    %v867 = vmax.f32 %v865, %v866
    %v868 = vrot.slane %v867, 1
    %v869 = vmax.f32 %v867, %v868
    %vm872 = vcmask 1041409
    %v873 = vsel %vm872, %v869, %v862
    %875 = vst [vmem:[#allocation2] sm:$0x3] %v873
    // Predicated region
    $region18: #{gcn_forward.1} parent=1 // pred_check
      _
    $region19: #{gcn_forward.1} parent=1 // pred_check_branch
      %877 = sbr.rel (0) target = $region21
    $region20: #{gcn_forward.1} parent=1 // pred_region
      _
    $region21: #{gcn_forward.1} parent=1 // pred_fallthru
      _
    // Predicated region
    $region22: #{gcn_forward.1} parent=1 // pred_check
      _
    $region23: #{gcn_forward.1} parent=1 // pred_check_branch
      %879 = sbr.rel (0) target = $region25
    $region24: #{gcn_forward.1} parent=1 // pred_region
      %s881 = ssub.s32 32, 32
      %882 = vsyncadd [#allocation3], %s881
      %s884 = sshll.u32 [#allocation2], 4
      %s885 = int_to_ptr.vmem [resolvable:$true] %s884
      %887 = dma.vmem_to_hbm [thread:$0]  %s885, 32, %s5, [#allocation3]
    $region25: #{gcn_forward.1} parent=1 // pred_fallthru
      _
    // Predicated region
    $region26: #{gcn_forward.1} parent=1 // pred_check
      _
    $region27: #{gcn_forward.1} parent=1 // pred_check_branch
      %889 = sbr.rel (0) target = $region29
    $region28: #{gcn_forward.1} parent=1 // pred_region
      _
    $region29: #{gcn_forward.1} parent=1 // pred_fallthru
      _
    // Predicated region
    $region30: #{gcn_forward.1} parent=1 // pred_check
      _
    $region31: #{gcn_forward.1} parent=1 // pred_check_branch
      %891 = sbr.rel (0) target = $region33
    $region32: #{gcn_forward.1} parent=1 // pred_region
      %892 = dma.done [#allocation3], 32
    $region33: #{gcn_forward.1} parent=1 // pred_fallthru
      _
    %893 = vsyncpa [#allocation3], 1

</llo_original>
